<compile_context>
chip_gen: v7x
topology: tpu7x:2x2x1
jax: 0.10.0
libtpu: 0.0.40
codegen_flags: <defaults>
</compile_context>

<pallas_src>
import math

import jax
import jax.numpy as jnp
import numpy as np
from jax.experimental import pallas as pl
from jax.experimental.pallas import tpu as pltpu


# --------------------------------------------------------------------------- #
# Kernel
# --------------------------------------------------------------------------- #
def _sgc_kernel(x_ref, wt_ref, b_ref, o_ref):
    # x_ref:  (TM, nfeat)       VMEM -- one row tile of features
    # wt_ref: (nfeat, nclass)   VMEM -- W^T, resident across the grid
    # b_ref:  (1, nclass)       VMEM -- bias, resident across the grid
    # o_ref:  (TM, nclass)      VMEM -- output tile at its real width
    acc = jnp.dot(x_ref[...], wt_ref[...], preferred_element_type=jnp.float32)
    o_ref[...] = (acc + b_ref[...]).astype(o_ref.dtype)


# --------------------------------------------------------------------------- #
# Wrapper
# --------------------------------------------------------------------------- #
def _round_up(v, m):
    return ((v + m - 1) // m) * m


def _choose_tm(n_rows, nfeat, nclass, itemsize):
    """Pick the row tile size TM.

    Largest multiple of 8 whose double-buffered x/out tiles (plus the resident
    W^T and bias) fit a conservative 32 MiB VMEM budget (safe on every TPU
    generation, including v7x's 64 MiB physical VMEM), capped at 8192 rows and
    clamped so the parallel grid has at least 2 tiles when N allows it (so both
    v7x TensorCores get work).
    """
    budget = 32 * 1024 * 1024
    # W^T + bias are grid-resident; count them at 2x since Pallas double-buffers
    # inputs by default (we do not rely on single-buffering for portability).
    resident = 2 * itemsize * (nfeat * nclass + nclass)
    avail = max(budget - resident, 1 << 20)
    per_row = 2 * itemsize * (nfeat + nclass)        # double-buffered x + out row
    tm = avail // max(per_row, 1)
    tm = max(8, min(8192, (tm // 8) * 8))
    if n_rows > 8:
        # >= 2 row tiles so dimension_semantics=("parallel",) can split across
        # v7x's two TensorCores (no-op on single-core v5e/v6e).
        tm = min(tm, _round_up(pl.cdiv(n_rows, 2), 8))
    if tm >= n_rows:
        tm = n_rows                                   # single full-extent block
    return tm


def prepare_params(weight, bias):
    """Transpose nn.Linear params once (weight: (nclass, nfeat), bias: (nclass,))."""
    wt = jnp.asarray(weight).T                        # (nfeat, nclass)
    b2 = jnp.asarray(bias).reshape(1, -1)             # (1, nclass)
    return wt, b2


@jax.jit
def sgc_forward_prepared(x, wt, bias2d):
    """x: (N, nfeat); wt: (nfeat, nclass); bias2d: (1, nclass)."""
    N, nfeat = x.shape
    nclass = wt.shape[1]
    itemsize = jnp.dtype(x.dtype).itemsize

    tm = _choose_tm(N, nfeat, nclass, itemsize)
    grid = (pl.cdiv(N, tm),)

    # Actual VMEM footprint (+ headroom for compiler scratch), capped well below
    # v7x's 64 MiB physical VMEM.
    used_vmem = (2 * itemsize * (nfeat * nclass + nclass)
                 + 2 * itemsize * tm * (nfeat + nclass))
    vmem_limit = int(min(48 * 1024 * 1024, max(used_vmem + (4 << 20), 16 << 20)))

    # Advisory cost estimate reflecting the bytes actually touched (no padding).
    cost = pl.CostEstimate(
        flops=2 * N * nfeat * nclass,
        transcendentals=0,
        bytes_accessed=itemsize * (N * nfeat + nfeat * nclass + nclass + N * nclass),
    )

    return pl.pallas_call(
        _sgc_kernel,
        out_shape=jax.ShapeDtypeStruct((N, nclass), x.dtype),
        grid=grid,
        in_specs=[
            pl.BlockSpec((tm, nfeat), lambda i: (i, 0)),      # x row tiles (streamed)
            pl.BlockSpec((nfeat, nclass), lambda i: (0, 0)),  # W^T resident
            pl.BlockSpec((1, nclass), lambda i: (0, 0)),      # bias resident
        ],
        out_specs=pl.BlockSpec((tm, nclass), lambda i: (i, 0)),
        compiler_params=pltpu.CompilerParams(
            dimension_semantics=("parallel",),   # independent row tiles
            vmem_limit_bytes=vmem_limit,
        ),
        cost_estimate=cost,
    )(x, wt, bias2d)


def sgc_forward(x, weight, bias):
    """Convenience entry point matching SGC.forward: y = x @ W^T + b."""
    wt, b2 = prepare_params(weight, bias)
    return sgc_forward_prepared(x, wt, b2)


# --------------------------------------------------------------------------- #
# Params init (matches nn.Linear defaults: U(-1/sqrt(nfeat), 1/sqrt(nfeat)))
# --------------------------------------------------------------------------- #
def init_linear_params(key, nfeat, nclass):
    kw, kb = jax.random.split(key)
    bound = 1.0 / math.sqrt(nfeat)
    weight = jax.random.uniform(kw, (nclass, nfeat), jnp.float32, -bound, bound)
    bias = jax.random.uniform(kb, (nclass,), jnp.float32, -bound, bound)
    return weight, bias


def _np_ref(x, weight, bias):
    # Exact (f64) reference on host, independent of TPU matmul pass count.
    return (np.asarray(x, np.float64) @ np.asarray(weight, np.float64).T
            + np.asarray(bias, np.float64))


if __name__ == "__main__":
    key = jax.random.PRNGKey(0)
    k_x, k_p, k_x2 = jax.random.split(key, 3)

    # Small shapes consistent with the module: 16 nodes, 32 features, 8 classes.
    N, nfeat, nclass = 16, 32, 8
    x = jax.random.normal(k_x, (N, nfeat), jnp.float32)
    weight, bias = init_linear_params(k_p, nfeat, nclass)
    wt, b2 = prepare_params(weight, bias)

    out = jax.block_until_ready(sgc_forward_prepared(x, wt, b2))
    ref = _np_ref(x, weight, bias)
    assert out.shape == (N, nclass)
    assert np.max(np.abs(np.asarray(out, np.float64) - ref)) < 1e-2

    # Second check: ragged multi-tile (grid > 1) path.
    N2 = 1100
    x2 = jax.random.normal(k_x2, (N2, nfeat), jnp.float32)
    out2 = jax.block_until_ready(sgc_forward_prepared(x2, wt, b2))
    ref2 = _np_ref(x2, weight, bias)
    assert out2.shape == (N2, nclass)
    assert np.max(np.abs(np.asarray(out2, np.float64) - ref2)) < 1e-2

    print("KERNEL_OK")
</pallas_src>

<mosaic_0001>
module attributes {stable_mosaic.version = 11 : i64} {
  func.func @_sgc_kernel(%arg0: i32, %arg1: memref<8x32xf32, #tpu.memory_space<vmem>>, %arg2: memref<32x8xf32, #tpu.memory_space<vmem>>, %arg3: memref<1x8xf32, #tpu.memory_space<vmem>>, %arg4: memref<8x8xf32, #tpu.memory_space<vmem>>) attributes {dimension_semantics = [#tpu.dimension_semantics<parallel>], iteration_bounds = array<i64: 2>, scalar_prefetch = 0 : i64, scratch_operands = 0 : i64, tpu.core_type = #tpu.core_type<tc>, window_params = [{transform_indices = @transform_0, window_bounds = array<i64: 8, 32>}, {pipeline_mode = #tpu.pipeline_mode<synchronous>, transform_indices = @transform_1, window_bounds = array<i64: 32, 8>}, {pipeline_mode = #tpu.pipeline_mode<synchronous>, transform_indices = @transform_2, window_bounds = array<i64: 1, 8>}, {transform_indices = @transform_3, window_bounds = array<i64: 8, 8>}]} {
    %c0 = arith.constant 0 : index
    %c0_0 = arith.constant 0 : index
    %0 = vector.load %arg1[%c0, %c0_0] : memref<8x32xf32, #tpu.memory_space<vmem>>, vector<8x32xf32>
    %c0_1 = arith.constant 0 : index
    %c0_2 = arith.constant 0 : index
    %1 = vector.load %arg2[%c0_1, %c0_2] : memref<32x8xf32, #tpu.memory_space<vmem>>, vector<32x8xf32>
    %cst = arith.constant dense<0.000000e+00> : vector<8x8xf32>
    %2 = tpu.matmul %0, %1, %cst {dimension_numbers = #tpu.dot_dimension_numbers<[1], [0], [0], [1], [0, 0, 1, 1], [], []>} : vector<8x32xf32>, vector<32x8xf32>, vector<8x8xf32> -> vector<8x8xf32>
    %c0_3 = arith.constant 0 : index
    %c0_4 = arith.constant 0 : index
    %3 = vector.load %arg3[%c0_3, %c0_4] : memref<1x8xf32, #tpu.memory_space<vmem>>, vector<1x8xf32>
    %4 = vector.broadcast %3 : vector<1x8xf32> to vector<8x8xf32>
    %5 = arith.addf %2, %4 : vector<8x8xf32>
    %c0_5 = arith.constant 0 : index
    %c0_6 = arith.constant 0 : index
    %6 = vector.load %arg4[%c0_5, %c0_6] : memref<8x8xf32, #tpu.memory_space<vmem>>, vector<8x8xf32>
    tpu.vector_store %arg4[%c0_5, %c0_6], %5 {strides = array<i32>} : memref<8x8xf32, #tpu.memory_space<vmem>>, vector<8x8xf32>,
    return
  }
  func.func @transform_0(%arg0: i32) -> (i32, i32) {
    %c0_i32 = arith.constant 0 : i32
    %c0_i32_0 = arith.constant 0 : i32
    return %arg0, %c0_i32 : i32, i32
  }
  func.func @transform_1(%arg0: i32) -> (i32, i32) {
    %c0_i32 = arith.constant 0 : i32
    %c0_i32_0 = arith.constant 0 : i32
    %c0_i32_1 = arith.constant 0 : i32
    return %c0_i32, %c0_i32_0 : i32, i32
  }
  func.func @transform_2(%arg0: i32) -> (i32, i32) {
    %c0_i32 = arith.constant 0 : i32
    %c0_i32_0 = arith.constant 0 : i32
    %c0_i32_1 = arith.constant 0 : i32
    return %c0_i32, %c0_i32_0 : i32, i32
  }
  func.func @transform_3(%arg0: i32) -> (i32, i32) {
    %c0_i32 = arith.constant 0 : i32
    %c0_i32_0 = arith.constant 0 : i32
    return %arg0, %c0_i32 : i32, i32
  }
}

</mosaic_0001>

<llo_original>
// kernel: sgc_forward_prepared.1
$region0: #{sgc_forward_prepared.1}
  #allocation0 [shape = 'u32[]', space=smem, size = 0x4, offset = 0x4, fixed_abs, tag = 'smem constant byte address 0x4 - core index']
  #allocation1 [shape = 'u32[144,128]{1,0:T(1,128)}', space=vmem, size = 0x12000, scoped, tag = 'internal scratch']
  %s0 = inlined_call_operand.vmem [shape: f32[16,32], index: 0, kind: input, shape index: {}]
  %s1 = inlined_call_operand.vmem [shape: f32[32,8], index: 1, kind: input, shape index: {}]
  %s2 = inlined_call_operand.vmem [shape: f32[1,8], index: 2, kind: input, shape index: {}]
  %s3 = inlined_call_operand.vmem [shape: f32[16,8], index: 3, kind: output, shape index: {}]
  %s4 = sld [smem:[#allocation0]]
  $region45: #{sgc_forward_prepared.1} parent=0
    _
  %s6 = ssub.s32 1, %s4
  %s7 = scalar_select 0, %s6, %s4
  loop: start=0, step=1, limit=4
  $region2: #{sgc_forward_prepared.1} parent=0 // loop_pre_header
    _
  $region3: #{sgc_forward_prepared.1} parent=0 // loop_header
    %s9 = sphi 0, %s13
    %p10 = scmp.ge.s32.totalorder %s9, 4
    %s19 = sphi 0, %s21
    %s22 = sphi 0, %s19
    %s23 = sphi 0, %s22
    %s39 = sphi 0, %s23
    %s43 = sphi 0, %s43
    %s45 = sphi 0, %s43
    %s46 = sphi 0, %s45
    %s60 = sphi 0, %s46
    %s64 = sphi 0, %s64
    %s66 = sphi 0, %s64
    %s67 = sphi 0, %s66
    %s81 = sphi 0, %s67
    %s87 = sphi 0, %s89
    %s90 = sphi 0, %s87
    %s91 = sphi 0, %s90
    %s107 = sphi 0, %s91
  $region4: #{sgc_forward_prepared.1} parent=0 // loop_header_branch
    %12 = sbr.rel (%p10) target = $region8
  $region5: #{sgc_forward_prepared.1} parent=0 // loop_body
    %s14 = ssub.s32 %s9, 1
    %s15 = ssub.s32 %s9, 2
    %s16 = sadd.s32 %s9, 1
    %s17 = ssub.s32 %s9, %s16
    %p18 = scmp.eq.s32.totalorder %s17, 0
    %s20 = sadd.s32 %s19, 1
    %s21 = scalar_select %p18, %s19, %s20
    %p24 = pneg %p18
    %p25 = scmp.eq.s32.totalorder %s9, 1
    %p26 = por %p24, %p25
    %p27 = scmp.ne.s32.totalorder %s19, %s22
    %p28 = scmp.eq.s32.totalorder %s9, 0
    %p29 = por %p27, %p28
    %p30 = scmp.ne.s32.totalorder %s19, %s22
    %p31 = scmp.eq.s32.totalorder %s14, 1
    %p32 = por %p30, %p31
    %p33 = scmp.ne.s32.totalorder %s22, %s23
    %p34 = scmp.eq.s32.totalorder %s14, 0
    %p35 = por %p33, %p34
    %p36 = scmp.ne.s32.totalorder %s22, %s23
    %p37 = scmp.eq.s32.totalorder %s15, 1
    %p38 = por %p36, %p37
    %p40 = scmp.ne.s32.totalorder %s23, %s39
    %p41 = scmp.eq.s32.totalorder %s15, 0
    %p42 = por %p40, %p41
    %s44 = sadd.s32 %s43, 1
    %p47 = scmp.eq.s32.totalorder %s9, 1
    %p48 = scmp.ne.s32.totalorder %s43, %s45
    %p49 = scmp.eq.s32.totalorder %s9, 0
    %p50 = por %p48, %p49
    %p51 = scmp.ne.s32.totalorder %s43, %s45
    %p52 = scmp.eq.s32.totalorder %s14, 1
    %p53 = por %p51, %p52
    %p54 = scmp.ne.s32.totalorder %s45, %s46
    %p55 = scmp.eq.s32.totalorder %s14, 0
    %p56 = por %p54, %p55
    %p57 = scmp.ne.s32.totalorder %s45, %s46
    %p58 = scmp.eq.s32.totalorder %s15, 1
    %p59 = por %p57, %p58
    %p61 = scmp.ne.s32.totalorder %s46, %s60
    %p62 = scmp.eq.s32.totalorder %s15, 0
    %p63 = por %p61, %p62
    %s65 = sadd.s32 %s64, 1
    %p68 = scmp.eq.s32.totalorder %s9, 1
    %p69 = scmp.ne.s32.totalorder %s64, %s66
    %p70 = scmp.eq.s32.totalorder %s9, 0
    %p71 = por %p69, %p70
    %p72 = scmp.ne.s32.totalorder %s64, %s66
    %p73 = scmp.eq.s32.totalorder %s14, 1
    %p74 = por %p72, %p73
    %p75 = scmp.ne.s32.totalorder %s66, %s67
    %p76 = scmp.eq.s32.totalorder %s14, 0
    %p77 = por %p75, %p76
    %p78 = scmp.ne.s32.totalorder %s66, %s67
    %p79 = scmp.eq.s32.totalorder %s15, 1
    %p80 = por %p78, %p79
    %p82 = scmp.ne.s32.totalorder %s67, %s81
    %p83 = scmp.eq.s32.totalorder %s15, 0
    %p84 = por %p82, %p83
    %s85 = ssub.s32 %s9, %s16
    %p86 = scmp.eq.s32.totalorder %s85, 0
    %s88 = sadd.s32 %s87, 1
    %s89 = scalar_select %p86, %s87, %s88
    %p92 = pneg %p86
    %p93 = scmp.eq.s32.totalorder %s9, 1
    %p94 = por %p92, %p93
    %p95 = scmp.ne.s32.totalorder %s87, %s90
    %p96 = scmp.eq.s32.totalorder %s9, 0
    %p97 = por %p95, %p96
    %p98 = scmp.ne.s32.totalorder %s87, %s90
    %p99 = scmp.eq.s32.totalorder %s14, 1
    %p100 = por %p98, %p99
    %p101 = scmp.ne.s32.totalorder %s90, %s91
    %p102 = scmp.eq.s32.totalorder %s14, 0
    %p103 = por %p101, %p102
    %p104 = scmp.ne.s32.totalorder %s90, %s91
    %p105 = scmp.eq.s32.totalorder %s15, 1
    %p106 = por %p104, %p105
    %p108 = scmp.ne.s32.totalorder %s91, %s107
    %p109 = scmp.eq.s32.totalorder %s15, 0
    %p110 = por %p108, %p109
    %p111 = scmp.le.s32.totalorder 1, %s9
    %p112 = scmp.lt.s32.totalorder %s9, 3
    %p113 = pnand %p111, %p112
    %p114 = pneg %p113
    // Predicated region
    $region9: #{sgc_forward_prepared.1} parent=5 // pred_check
      _
    $region10: #{sgc_forward_prepared.1} parent=5 // pred_check_branch
      %116 = sbr.rel (%p113) target = $region12
    $region11: #{sgc_forward_prepared.1} parent=5 // pred_region
      %s117 = ssub.s32 %s9, 1
      // Predicated region
      $region13: #{sgc_forward_prepared.1} parent=11 // pred_check
        %p118 = pneg %p56
      $region14: #{sgc_forward_prepared.1} parent=11 // pred_check_branch
        %120 = sbr.rel (%p118) target = $region16
      $region15: #{sgc_forward_prepared.1} parent=11 // pred_region
        _
      $region16: #{sgc_forward_prepared.1} parent=11 // pred_fallthru
        _
      // Predicated region
      $region17: #{sgc_forward_prepared.1} parent=11 // pred_check
        %p121 = pneg %p77
      $region18: #{sgc_forward_prepared.1} parent=11 // pred_check_branch
        %123 = sbr.rel (%p121) target = $region20
      $region19: #{sgc_forward_prepared.1} parent=11 // pred_region
        _
      $region20: #{sgc_forward_prepared.1} parent=11 // pred_fallthru
        _
    $region12: #{sgc_forward_prepared.1} parent=5 // pred_fallthru
      _
    %p124 = scmp.lt.s32.totalorder %s9, 2
    // Predicated region
    $region21: #{sgc_forward_prepared.1} parent=5 // pred_check
      %p125 = pneg %p124
    $region22: #{sgc_forward_prepared.1} parent=5 // pred_check_branch
      %127 = sbr.rel (%p125) target = $region24
    $region23: #{sgc_forward_prepared.1} parent=5 // pred_region
      // Predicated region
      $region25: #{sgc_forward_prepared.1} parent=23 // pred_check
        %p128 = pneg %p29
      $region26: #{sgc_forward_prepared.1} parent=23 // pred_check_branch
        %130 = sbr.rel (%p128) target = $region28
      $region27: #{sgc_forward_prepared.1} parent=23 // pred_region
        %p131 = scmp.lt.s32.totalorder %s9, 1
        %s132 = scalar_select %p131, %s9, 1
        %s133 = smul.addr %s132, 8
        %s134 = scalar_lea.vmem %s0, %s133
      $region28: #{sgc_forward_prepared.1} parent=23 // pred_fallthru
        _
    $region24: #{sgc_forward_prepared.1} parent=5 // pred_fallthru
      _
    %p135 = scmp.le.s32.totalorder 1, %s9
    %p136 = scmp.lt.s32.totalorder %s9, 3
    %p137 = pnand %p135, %p136
    %p138 = pneg %p137
    // Predicated region
    $region29: #{sgc_forward_prepared.1} parent=5 // pred_check
      _
    $region30: #{sgc_forward_prepared.1} parent=5 // pred_check_branch
      %140 = sbr.rel (%p137) target = $region32
    $region31: #{sgc_forward_prepared.1} parent=5 // pred_region
      %s141 = ssub.s32 %s9, 1
      %p142 = scmp.lt.s32.totalorder %s14, 1
      %s143 = scalar_select %p142, %s14, 1
      %s144 = smul.addr %s143, 8
      %s145 = scalar_lea.vmem %s0, %s144
      %p146 = pneg %p35
      %p147 = pneg %p32
      %p148 = pneg %p56
      %p149 = pneg %p53
      %p150 = pneg %p77
      %p151 = pneg %p74
      %p152 = pneg %p103
      %p153 = pneg %p100
      %p154 = scmp.lt.s32.totalorder %s14, 1
      %s155 = scalar_select %p154, %s14, 1
      %s156 = smul.addr %s155, 8
      %s157 = scalar_lea.vmem %s3, %s156
      %p158 = scmp.lt.s32.totalorder %s14, 1
      %s159 = scalar_select %p158, %s14, 1
      %s160 = smul.addr %s159, 8
      %s161 = scalar_lea.vmem %s0, %s160
      %p162 = scmp.lt.s32.totalorder %s14, 1
      %s163 = scalar_select %p162, %s14, 1
      %s164 = smul.addr %s163, 8
      %s165 = scalar_lea.vmem %s3, %s164
      %v166 = vld [vmem:[%s161] sm:$0xff]
      %v167 = vld [vmem:[%s1] sm:$0xff]
      %v168 = vld [vmem:[%s1 + $0x8] sm:$0xff]
      %v169 = vld [vmem:[%s1 + $0x10] sm:$0xff]
      %v170 = vld [vmem:[%s1 + $0x18] sm:$0xff]
      %v171 = vld [vmem:[%s2] sm:$0x1]
      %v173 = vlaneseq
      %v174 = vshrl.u32 %v173, 7
      %v175 = vsub.s32 0, %v174
      %v176 = vrot.slane %v171, %v175
      %vm178 = vcmask 261120
      %v180 = vsel %vm178, %v166, 0
      %182 = vmatprep.subr.mxu0 0.0
      %183 = vmatpush1.msra.mxu0 %v167
      %184 = vmatprep.subr.mxu0 0.0
      %185 = vmatpush1.msra.mxu0 %v168
      %186 = vmatprep.subr.mxu0 0.0
      %187 = vmatpush1.msra.mxu0 %v169
      %188 = vmatprep.subr.mxu0 0.0
      %189 = vmatpush1.msra.mxu0 %v170
      %190 = vmatprep.subr.mxu0 0.0
      %191 = vmatpush1.msra.mxu0 0.0
      %192 = vmatprep.subr.mxu0 0.0
      %193 = vmatpush1.msra.mxu0 0.0
      %194 = vmatprep.subr.mxu0 0.0
      %195 = vmatpush1.msra.mxu0 0.0
      %196 = vmatprep.subr.mxu0 0.0
      %197 = vmatpush1.msra.mxu0 0.0
      %198 = vmatprep.subr.mxu0 0.0
      %199 = vmatpush1.msra.mxu0 0.0
      %200 = vmatprep.subr.mxu0 0.0
      %201 = vmatpush1.msra.mxu0 0.0
      %202 = vmatprep.subr.mxu0 0.0
      %203 = vmatpush1.msra.mxu0 0.0
      %204 = vmatprep.subr.mxu0 0.0
      %205 = vmatpush1.msra.mxu0 0.0
      %206 = vmatprep.subr.mxu0 0.0
      %207 = vmatpush1.msra.mxu0 0.0
      %208 = vmatprep.subr.mxu0 0.0
      %209 = vmatpush1.msra.mxu0 0.0
      %210 = vmatprep.subr.mxu0 0.0
      %211 = vmatpush1.msra.mxu0 0.0
      %212 = vmatprep.subr.mxu0 0.0
      %213 = vmatpush1.msra.mxu0 0.0
      %214 = vmatprep.subr.mxu0 0.0
      %215 = vmatpush1.msra.mxu0 0.0
      %216 = vmatprep.subr.mxu0 0.0
      %217 = vmatpush1.msra.mxu0 0.0
      %218 = vmatprep.subr.mxu0 0.0
      %219 = vmatpush1.msra.mxu0 0.0
      %220 = vmatprep.subr.mxu0 0.0
      %221 = vmatpush1.msra.mxu0 0.0
      %222 = vmatprep.subr.mxu0 0.0
      %223 = vmatpush1.msra.mxu0 0.0
      %224 = vmatprep.subr.mxu0 0.0
      %225 = vmatpush1.msra.mxu0 0.0
      %226 = vmatprep.subr.mxu0 0.0
      %227 = vmatpush1.msra.mxu0 0.0
      %228 = vmatprep.subr.mxu0 0.0
      %229 = vmatpush1.msra.mxu0 0.0
      %230 = vmatprep.subr.mxu0 0.0
      %231 = vmatpush1.msra.mxu0 0.0
      %232 = vmatprep.subr.mxu0 0.0
      %233 = vmatpush1.msra.mxu0 0.0
      %234 = vmatprep.subr.mxu0 0.0
      %235 = vmatpush1.msra.mxu0 0.0
      %236 = vmatprep.subr.mxu0 0.0
      %237 = vmatpush1.msra.mxu0 0.0
      %238 = vmatprep.subr.mxu0 0.0
      %239 = vmatpush1.msra.mxu0 0.0
      %240 = vmatprep.subr.mxu0 0.0
      %241 = vmatpush1.msra.mxu0 0.0
      %242 = vmatprep.subr.mxu0 0.0
      %243 = vmatpush1.msra.mxu0 0.0
      %244 = vmatprep.subr.mxu0 0.0
      %245 = vmatpush1.msra.mxu0 0.0
      %246 = vmatprep.mubr.f32.mxu0 0.0
      %247 = vmatmul.mubr.f32.gmra.mrb[0].mxu0 %v180
      %v248 = vpop.f32.mrb[0].mxu0
      %v249 = vadd.f32 %v176, %v248
      %v250 = vpop.f32.mrb[0].mxu0
      %251 = vdwg.mxu0
      %vm252 = vcmask 64512
      %253 = vst.msk [vmem:[%s165] sm:$0xff] %vm252, %v249
      %p254 = scmp.lt.s32.totalorder %s14, 1
      %s255 = scalar_select %p254, %s14, 1
      %s256 = smul.addr %s255, 8
      %s257 = scalar_lea.vmem %s3, %s256
      // Predicated region
      $region33: #{sgc_forward_prepared.1} parent=31 // pred_check
        %p258 = pneg %p100
      $region34: #{sgc_forward_prepared.1} parent=31 // pred_check_branch
        %260 = sbr.rel (%p258) target = $region36
      $region35: #{sgc_forward_prepared.1} parent=31 // pred_region
        _
      $region36: #{sgc_forward_prepared.1} parent=31 // pred_fallthru
        _
    $region32: #{sgc_forward_prepared.1} parent=5 // pred_fallthru
      _
    %p261 = scmp.le.s32.totalorder 2, %s9
    // Predicated region
    $region37: #{sgc_forward_prepared.1} parent=5 // pred_check
      %p262 = pneg %p261
    $region38: #{sgc_forward_prepared.1} parent=5 // pred_check_branch
      %264 = sbr.rel (%p262) target = $region40
    $region39: #{sgc_forward_prepared.1} parent=5 // pred_region
      %s265 = ssub.s32 %s9, 2
      // Predicated region
      $region41: #{sgc_forward_prepared.1} parent=39 // pred_check
        %p266 = pneg %p106
      $region42: #{sgc_forward_prepared.1} parent=39 // pred_check_branch
        %268 = sbr.rel (%p266) target = $region44
      $region43: #{sgc_forward_prepared.1} parent=39 // pred_region
        %p269 = scmp.lt.s32.totalorder %s15, 1
        %s270 = scalar_select %p269, %s15, 1
        %s271 = smul.addr %s270, 8
        %s272 = scalar_lea.vmem %s3, %s271
      $region44: #{sgc_forward_prepared.1} parent=39 // pred_fallthru
        _
    $region40: #{sgc_forward_prepared.1} parent=5 // pred_fallthru
      _
  $region6: #{sgc_forward_prepared.1} parent=0 // loop_footer
    %s13 = sadd.s32 1, %s9
  $region7: #{sgc_forward_prepared.1} parent=0 // loop_footer_branch
    %8 = sbr.rel target = $region3
  $region8: #{sgc_forward_prepared.1} parent=0 // loop_exit
    _

</llo_original>
